<compile_context>
chip_gen: v7x
topology: tpu7x:2x2x1
jax: 0.10.0
libtpu: 0.0.40
codegen_flags: <defaults>
</compile_context>

<pallas_src>
import jax
import jax.numpy as jnp
from jax.experimental import pallas as pl
from jax.experimental.pallas import tpu as pltpu


T_TEMPERATURE = 10.0
H1_PAD = 512    # fc1 hidden 500 -> 512 (lane aligned)
H2_PAD = 128    # fc2 hidden 100 -> 128 (lane aligned)
TB_CAP = 4096   # absolute batch-tile cap


def _cdiv(a, b):
    return -(-a // b)


def _round_up(x, m):
    return _cdiv(x, m) * m


def _pad2d(a, rows, cols):
    pr, pc = rows - a.shape[0], cols - a.shape[1]
    if pr == 0 and pc == 0:
        return a
    return jnp.pad(a, ((0, pr), (0, pc)))


def _tpu_kind():
    try:
        return jax.devices()[0].device_kind.lower()
    except Exception:
        return ""


def _vmem_limit_bytes(kind):
    # Per-generation scoped-VMEM budget (leave headroom below physical).
    if "v7" in kind or "7x" in kind:
        return 48 * 1024 * 1024      # 64 MiB physical per TC on v7x
    if "v5" in kind or "v6" in kind:
        return 96 * 1024 * 1024      # 128 MiB physical per TC
    return 32 * 1024 * 1024          # conservative default


def _choose_tb(batch, d_in_pad, n_pad, vmem_budget, max_tb):
    """Largest multiple-of-8 batch tile whose VMEM footprint fits the budget."""
    weights = ((d_in_pad * H1_PAD + H1_PAD * H2_PAD + H2_PAD * n_pad) * 2 * 2
               + (H1_PAD + H2_PAD + n_pad) * 4 * 2)

    def usage(tb):
        x_buf = 2 * tb * d_in_pad * 4                        # f32 x double buffer
        inter = tb * (H1_PAD * 6 + H2_PAD * 6 + n_pad * 16)  # h1/h2/att temporaries
        return x_buf + weights + inter

    tb = min(_round_up(batch, 8), _round_up(max_tb, 8), TB_CAP)
    while tb > 8 and usage(tb) > 0.75 * vmem_budget:
        tb = max(8, _round_up(tb // 2, 8))
    return tb


def _make_kernel(batch, tb, tiles_per_split, n_num, n_pad, apply_row_mask):
    inv_t = 1.0 / T_TEMPERATURE

    def kernel(x_ref, w1_ref, b1_ref, w2_ref, b2_ref, w3_ref, b3_ref,
               out_ref, acc_ref):
        t = pl.program_id(1)

        @pl.when(t == 0)
        def _init():
            acc_ref[...] = jnp.zeros_like(acc_ref)

        # Cast the f32 x tile to bf16 in-kernel (no wrapper-side HBM pass);
        # bf16 MXU operands with f32 accumulation, bias/relu/sigmoid in f32.
        xb = x_ref[...].astype(jnp.bfloat16)
        h1 = jnp.dot(xb, w1_ref[...],
                     preferred_element_type=jnp.float32) + b1_ref[...]
        h1 = jnp.maximum(h1, 0.0).astype(jnp.bfloat16)   # bf16 intermediate
        h2 = jnp.dot(h1, w2_ref[...],
                     preferred_element_type=jnp.float32) + b2_ref[...]
        h2 = jnp.maximum(h2, 0.0).astype(jnp.bfloat16)
        logits = jnp.dot(h2, w3_ref[...],
                         preferred_element_type=jnp.float32) + b3_ref[...]
        s = jax.nn.sigmoid(logits)

        # softmax(s / T, axis=1): s in (0,1) so z in (0, 0.1) -> exp cannot
        # overflow, skip max subtraction. Padded output columns excluded.
        e = jnp.exp(s * inv_t)
        if n_num != n_pad:
            col = jax.lax.broadcasted_iota(jnp.int32, (tb, n_pad), 1)
            e = jnp.where(col < n_num, e, 0.0)
        denom = jnp.sum(e, axis=1, keepdims=True)
        att = e * pl.reciprocal(denom, approx=True)

        if apply_row_mask:
            # Zero-padded rows past the true batch contribute exactly zero.
            row0 = (pl.program_id(0) * tiles_per_split + t) * tb
            row = row0 + jax.lax.broadcasted_iota(jnp.int32, (tb, 1), 0)
            att = jnp.where(row < batch, att, 0.0)

        # Per-tile reduction as full-vreg VPU adds into an (8, n_pad)
        # accumulator; the single 8->1 sublane reduce happens in the wrapper.
        acc_ref[...] += jnp.sum(att.reshape(tb // 8, 8, n_pad), axis=0)

        @pl.when(t == tiles_per_split - 1)
        def _finalize():
            out_ref[...] = acc_ref[...]

    return kernel


def attention_layer_forward(x, w1, b1, w2, b2, w3, b3, *,
                            max_tb=TB_CAP, force_two_splits=False):
    """x: (B, n_num*last_dim) f32; weights stored (in, out). Returns (n_num,) f32."""
    batch, d_in = x.shape
    n_num = w3.shape[1]

    kind = _tpu_kind()
    is_v7x = ("v7" in kind) or ("7x" in kind)
    vmem_limit = _vmem_limit_bytes(kind)

    d_in_pad = _round_up(d_in, 128)
    n_pad = _round_up(n_num, 128)

    tb = _choose_tb(batch, d_in_pad, n_pad, vmem_limit, max_tb)
    total_tiles = _cdiv(batch, tb)
    num_splits = 2 if (total_tiles >= 2 and (is_v7x or force_two_splits)) else 1
    tiles_per_split = _cdiv(total_tiles, num_splits)
    rows_pad = num_splits * tiles_per_split * tb

    # x stays f32; zero-pad rows/cols so no block DMA runs out of bounds and
    # ragged tiles read deterministic zeros. Weights are bf16, biases f32.
    xp = _pad2d(x, rows_pad, d_in_pad)
    w1p = _pad2d(w1, d_in_pad, H1_PAD).astype(jnp.bfloat16)
    w2p = _pad2d(w2, H1_PAD, H2_PAD).astype(jnp.bfloat16)
    w3p = _pad2d(w3, H2_PAD, n_pad).astype(jnp.bfloat16)
    b1p = _pad2d(b1, 1, H1_PAD)
    b2p = _pad2d(b2, 1, H2_PAD)
    b3p = _pad2d(b3, 1, n_pad)

    kernel = _make_kernel(batch, tb, tiles_per_split, n_num, n_pad,
                          apply_row_mask=(rows_pad != batch))

    def resident(shape):
        return pl.BlockSpec(shape, lambda s, t: (0,) * len(shape))

    cost = pl.CostEstimate(
        flops=2 * rows_pad * (d_in_pad * H1_PAD + H1_PAD * H2_PAD + H2_PAD * n_pad),
        transcendentals=3 * rows_pad * n_pad,
        bytes_accessed=(xp.size * 4
                        + (w1p.size + w2p.size + w3p.size) * 2
                        + (b1p.size + b2p.size + b3p.size) * 4
                        + num_splits * 8 * n_pad * 4),
    )

    def run(dim_semantics):
        return pl.pallas_call(
            kernel,
            out_shape=jax.ShapeDtypeStruct((num_splits * 8, n_pad), jnp.float32),
            grid=(num_splits, tiles_per_split),
            in_specs=[
                pl.BlockSpec((tb, d_in_pad),
                             lambda s, t: (s * tiles_per_split + t, 0)),
                resident(w1p.shape), resident(b1p.shape),
                resident(w2p.shape), resident(b2p.shape),
                resident(w3p.shape), resident(b3p.shape),
            ],
            out_specs=pl.BlockSpec((8, n_pad), lambda s, t: (s, 0)),
            scratch_shapes=[pltpu.VMEM((8, n_pad), jnp.float32)],
            compiler_params=pltpu.CompilerParams(
                dimension_semantics=dim_semantics,
                vmem_limit_bytes=vmem_limit,
            ),
            cost_estimate=cost,
        )(xp, w1p, b1p, w2p, b2p, w3p, b3p)

    if is_v7x and num_splits == 2:
        # Shard the split axis across v7x's two TensorCores; fall back to the
        # generic "parallel" tag if CORE_PARALLEL is rejected by this build.
        try:
            out = jax.block_until_ready(run((pltpu.CORE_PARALLEL, pltpu.ARBITRARY)))
        except Exception:
            out = run(("parallel", "arbitrary"))
    else:
        out = run(("parallel", "arbitrary"))

    # Sum the per-split, per-sublane partial batch-sums, divide by the true
    # batch, drop lane padding (torch .squeeze()).
    parts = out.reshape(num_splits, 8, n_pad)
    return (jnp.sum(parts, axis=(0, 1)) / batch)[:n_num]


def reference_forward(x, w1, b1, w2, b2, w3, b3):
    """Pure-JAX f32 reference matching the PyTorch module."""
    h1 = jnp.maximum(x @ w1 + b1, 0.0)
    h2 = jnp.maximum(h1 @ w2 + b2, 0.0)
    s = jax.nn.sigmoid(h2 @ w3 + b3)
    a = jax.nn.softmax(s / T_TEMPERATURE, axis=1)
    return jnp.mean(a, axis=0)


def init_params(key, last_dim, n_num):
    """kaiming_normal_ (fan_in, gain=sqrt(2)) weights, zero biases.
    Weights stored transposed vs PyTorch: (in_features, out_features)."""
    d_in = n_num * last_dim
    k1, k2, k3 = jax.random.split(key, 3)

    def kaiming(k, fan_in, fan_out):
        std = jnp.sqrt(2.0 / fan_in)
        return jax.random.normal(k, (fan_in, fan_out), dtype=jnp.float32) * std

    w1 = kaiming(k1, d_in, 500)
    b1 = jnp.zeros((1, 500), jnp.float32)
    w2 = kaiming(k2, 500, 100)
    b2 = jnp.zeros((1, 100), jnp.float32)
    w3 = kaiming(k3, 100, n_num)
    b3 = jnp.zeros((1, n_num), jnp.float32)
    return w1, b1, w2, b2, w3, b3


if __name__ == "__main__":
    key = jax.random.PRNGKey(0)
    kx, kp, kx2 = jax.random.split(key, 3)

    # Small shapes consistent with the module: batch=8, last_dim=32, n_num=4.
    B, last_dim, n_num = 8, 32, 4
    x = jax.random.normal(kx, (B, n_num * last_dim), dtype=jnp.float32)
    params = init_params(kp, last_dim, n_num)

    out = jax.block_until_ready(attention_layer_forward(x, *params))
    ref = jax.block_until_ready(reference_forward(x, *params))
    assert out.shape == (n_num,)
    assert jnp.allclose(jnp.sum(out), 1.0, atol=1e-2)
    # bf16 matmul operands + approx reciprocal shift results by ~1e-3.
    assert jnp.allclose(out, ref, atol=5e-3), (out, ref)

    # Exercise the multi-tile / ragged / 2-split accumulator path with a
    # forced small tile (16 rows, 40-row batch -> 3 tiles over 2 splits).
    B2 = 40
    x2 = jax.random.normal(kx2, (B2, n_num * last_dim), dtype=jnp.float32)
    out2 = jax.block_until_ready(
        attention_layer_forward(x2, *params, max_tb=16, force_two_splits=True))
    ref2 = jax.block_until_ready(reference_forward(x2, *params))
    assert jnp.allclose(out2, ref2, atol=5e-3), (out2, ref2)

    print("KERNEL_OK")
</pallas_src>

<mosaic_0001>
module attributes {stable_mosaic.version = 11 : i64} {
  func.func @kernel(%arg0: i32, %arg1: i32, %arg2: memref<8x128xf32, #tpu.memory_space<vmem>>, %arg3: memref<128x512xbf16, #tpu.memory_space<vmem>>, %arg4: memref<1x512xf32, #tpu.memory_space<vmem>>, %arg5: memref<512x128xbf16, #tpu.memory_space<vmem>>, %arg6: memref<1x128xf32, #tpu.memory_space<vmem>>, %arg7: memref<128x128xbf16, #tpu.memory_space<vmem>>, %arg8: memref<1x128xf32, #tpu.memory_space<vmem>>, %arg9: memref<8x128xf32, #tpu.memory_space<vmem>>, %arg10: memref<8x128xf32, #tpu.memory_space<vmem>>) attributes {dimension_semantics = [#tpu.dimension_semantics<parallel>, #tpu.dimension_semantics<arbitrary>], iteration_bounds = array<i64: 1, 1>, scalar_prefetch = 0 : i64, scratch_operands = 1 : i64, tpu.core_type = #tpu.core_type<tc>, window_params = [{transform_indices = @transform_0, window_bounds = array<i64: 8, 128>}, {pipeline_mode = #tpu.pipeline_mode<synchronous>, transform_indices = @transform_1, window_bounds = array<i64: 128, 512>}, {pipeline_mode = #tpu.pipeline_mode<synchronous>, transform_indices = @transform_2, window_bounds = array<i64: 1, 512>}, {pipeline_mode = #tpu.pipeline_mode<synchronous>, transform_indices = @transform_3, window_bounds = array<i64: 512, 128>}, {pipeline_mode = #tpu.pipeline_mode<synchronous>, transform_indices = @transform_4, window_bounds = array<i64: 1, 128>}, {pipeline_mode = #tpu.pipeline_mode<synchronous>, transform_indices = @transform_5, window_bounds = array<i64: 128, 128>}, {pipeline_mode = #tpu.pipeline_mode<synchronous>, transform_indices = @transform_6, window_bounds = array<i64: 1, 128>}, {transform_indices = @transform_7, window_bounds = array<i64: 8, 128>}]} {
    %c0_i32 = arith.constant 0 : i32
    %0 = arith.cmpi eq, %arg1, %c0_i32 : i32
    %1 = arith.extui %0 : i1 to i32
    %c0_i32_0 = arith.constant 0 : i32
    %2 = arith.cmpi ne, %1, %c0_i32_0 : i32
    scf.if %2 {
      %cst_29 = arith.constant 0.000000e+00 : f32
      %52 = vector.broadcast %cst_29 : f32 to vector<8x128xf32>
      %c0_30 = arith.constant 0 : index
      %c0_31 = arith.constant 0 : index
      %53 = vector.load %arg10[%c0_30, %c0_31] : memref<8x128xf32, #tpu.memory_space<vmem>>, vector<8x128xf32>
      tpu.vector_store %arg10[%c0_30, %c0_31], %52 {strides = array<i32>} : memref<8x128xf32, #tpu.memory_space<vmem>>, vector<8x128xf32>,
    } else {
    }
    %c0 = arith.constant 0 : index
    %c0_1 = arith.constant 0 : index
    %3 = vector.load %arg2[%c0, %c0_1] : memref<8x128xf32, #tpu.memory_space<vmem>>, vector<8x128xf32>
    %4 = arith.truncf %3 : vector<8x128xf32> to vector<8x128xbf16>
    %c0_2 = arith.constant 0 : index
    %c0_3 = arith.constant 0 : index
    %5 = vector.load %arg3[%c0_2, %c0_3] : memref<128x512xbf16, #tpu.memory_space<vmem>>, vector<128x512xbf16>
    %cst = arith.constant dense<0.000000e+00> : vector<8x512xf32>
    %6 = tpu.matmul %4, %5, %cst {dimension_numbers = #tpu.dot_dimension_numbers<[1], [0], [0], [1], [0, 0, 1, 1], [], []>} : vector<8x128xbf16>, vector<128x512xbf16>, vector<8x512xf32> -> vector<8x512xf32>
    %c0_4 = arith.constant 0 : index
    %c0_5 = arith.constant 0 : index
    %7 = vector.load %arg4[%c0_4, %c0_5] : memref<1x512xf32, #tpu.memory_space<vmem>>, vector<1x512xf32>
    %8 = vector.broadcast %7 : vector<1x512xf32> to vector<8x512xf32>
    %9 = arith.addf %6, %8 : vector<8x512xf32>
    %cst_6 = arith.constant 0.000000e+00 : f32
    %10 = vector.broadcast %cst_6 : f32 to vector<8x512xf32>
    %11 = arith.maximumf %9, %10 : vector<8x512xf32>
    %12 = arith.truncf %11 : vector<8x512xf32> to vector<8x512xbf16>
    %c0_7 = arith.constant 0 : index
    %c0_8 = arith.constant 0 : index
    %13 = vector.load %arg5[%c0_7, %c0_8] : memref<512x128xbf16, #tpu.memory_space<vmem>>, vector<512x128xbf16>
    %cst_9 = arith.constant dense<0.000000e+00> : vector<8x128xf32>
    %14 = tpu.matmul %12, %13, %cst_9 {dimension_numbers = #tpu.dot_dimension_numbers<[1], [0], [0], [1], [0, 0, 1, 1], [], []>} : vector<8x512xbf16>, vector<512x128xbf16>, vector<8x128xf32> -> vector<8x128xf32>
    %c0_10 = arith.constant 0 : index
    %c0_11 = arith.constant 0 : index
    %15 = vector.load %arg6[%c0_10, %c0_11] : memref<1x128xf32, #tpu.memory_space<vmem>>, vector<1x128xf32>
    %16 = vector.broadcast %15 : vector<1x128xf32> to vector<8x128xf32>
    %17 = arith.addf %14, %16 : vector<8x128xf32>
    %cst_12 = arith.constant 0.000000e+00 : f32
    %18 = vector.broadcast %cst_12 : f32 to vector<8x128xf32>
    %19 = arith.maximumf %17, %18 : vector<8x128xf32>
    %20 = arith.truncf %19 : vector<8x128xf32> to vector<8x128xbf16>
    %c0_13 = arith.constant 0 : index
    %c0_14 = arith.constant 0 : index
    %21 = vector.load %arg7[%c0_13, %c0_14] : memref<128x128xbf16, #tpu.memory_space<vmem>>, vector<128x128xbf16>
    %cst_15 = arith.constant dense<0.000000e+00> : vector<8x128xf32>
    %22 = tpu.matmul %20, %21, %cst_15 {dimension_numbers = #tpu.dot_dimension_numbers<[1], [0], [0], [1], [0, 0, 1, 1], [], []>} : vector<8x128xbf16>, vector<128x128xbf16>, vector<8x128xf32> -> vector<8x128xf32>
    %c0_16 = arith.constant 0 : index
    %c0_17 = arith.constant 0 : index
    %23 = vector.load %arg8[%c0_16, %c0_17] : memref<1x128xf32, #tpu.memory_space<vmem>>, vector<1x128xf32>
    %24 = vector.broadcast %23 : vector<1x128xf32> to vector<8x128xf32>
    %25 = arith.addf %22, %24 : vector<8x128xf32>
    %26 = arith.negf %25 : vector<8x128xf32>
    %27 = math.exp %26 : vector<8x128xf32>
    %cst_18 = arith.constant 1.000000e+00 : f32
    %28 = vector.broadcast %cst_18 : f32 to vector<8x128xf32>
    %29 = arith.addf %28, %27 : vector<8x128xf32>
    %30 = arith.divf %28, %29 : vector<8x128xf32>
    %cst_19 = arith.constant 1.000000e-01 : f32
    %31 = vector.broadcast %cst_19 : f32 to vector<8x128xf32>
    %32 = arith.mulf %30, %31 : vector<8x128xf32>
    %33 = math.exp %32 : vector<8x128xf32>
    %34 = tpu.iota {dimensions = array<i32: 1>} : vector<8x128xi32>
    %c4_i32 = arith.constant 4 : i32
    %35 = vector.broadcast %c4_i32 : i32 to vector<8x128xi32>
    %36 = arith.cmpi slt, %34, %35 : vector<8x128xi32>
    %cst_20 = arith.constant 0.000000e+00 : f32
    %37 = vector.broadcast %cst_20 : f32 to vector<8x128xf32>
    %38 = arith.select %36, %33, %37 : vector<8x128xi1>, vector<8x128xf32>
    %cst_21 = arith.constant dense<0.000000e+00> : vector<8xf32>
    %39 = vector.multi_reduction <add>, %38, %cst_21 [1] : vector<8x128xf32> to vector<8xf32>
    %40 = vector.shape_cast %39 : vector<8xf32> to vector<8x1xf32>
    %41 = tpu.reciprocal %40 {approx = true} : vector<8x1xf32> -> vector<8x1xf32>
    %42 = vector.broadcast %41 : vector<8x1xf32> to vector<8x128xf32>
    %43 = arith.mulf %38, %42 : vector<8x128xf32>
    %c0_22 = arith.constant 0 : index
    %c0_23 = arith.constant 0 : index
    %44 = vector.load %arg10[%c0_22, %c0_23] : memref<8x128xf32, #tpu.memory_space<vmem>>, vector<8x128xf32>
    %45 = vector.shape_cast %43 : vector<8x128xf32> to vector<1x8x128xf32>
    %cst_24 = arith.constant dense<0.000000e+00> : vector<8x128xf32>
    %46 = vector.multi_reduction <add>, %45, %cst_24 [0] : vector<1x8x128xf32> to vector<8x128xf32>
    %47 = arith.addf %44, %46 : vector<8x128xf32>
    %c0_25 = arith.constant 0 : index
    %c0_26 = arith.constant 0 : index
    %48 = vector.load %arg10[%c0_25, %c0_26] : memref<8x128xf32, #tpu.memory_space<vmem>>, vector<8x128xf32>
    tpu.vector_store %arg10[%c0_25, %c0_26], %47 {strides = array<i32>} : memref<8x128xf32, #tpu.memory_space<vmem>>, vector<8x128xf32>,
    %c0_i32_27 = arith.constant 0 : i32
    %49 = arith.cmpi eq, %arg1, %c0_i32_27 : i32
    %50 = arith.extui %49 : i1 to i32
    %c0_i32_28 = arith.constant 0 : i32
    %51 = arith.cmpi ne, %50, %c0_i32_28 : i32
    scf.if %51 {
      %c0_29 = arith.constant 0 : index
      %c0_30 = arith.constant 0 : index
      %52 = vector.load %arg10[%c0_29, %c0_30] : memref<8x128xf32, #tpu.memory_space<vmem>>, vector<8x128xf32>
      %c0_31 = arith.constant 0 : index
      %c0_32 = arith.constant 0 : index
      %53 = vector.load %arg9[%c0_31, %c0_32] : memref<8x128xf32, #tpu.memory_space<vmem>>, vector<8x128xf32>
      tpu.vector_store %arg9[%c0_31, %c0_32], %52 {strides = array<i32>} : memref<8x128xf32, #tpu.memory_space<vmem>>, vector<8x128xf32>,
    } else {
    }
    return
  }
  func.func @transform_0(%arg0: i32, %arg1: i32) -> (i32, i32) {
    %c1_i32 = arith.constant 1 : i32
    %0 = arith.muli %arg0, %c1_i32 : i32
    %1 = arith.addi %0, %arg1 : i32
    %c0_i32 = arith.constant 0 : i32
    %c0_i32_0 = arith.constant 0 : i32
    return %1, %c0_i32 : i32, i32
  }
  func.func @transform_1(%arg0: i32, %arg1: i32) -> (i32, i32) {
    %c0_i32 = arith.constant 0 : i32
    %c0_i32_0 = arith.constant 0 : i32
    %c0_i32_1 = arith.constant 0 : i32
    return %c0_i32, %c0_i32_0 : i32, i32
  }
  func.func @transform_2(%arg0: i32, %arg1: i32) -> (i32, i32) {
    %c0_i32 = arith.constant 0 : i32
    %c0_i32_0 = arith.constant 0 : i32
    %c0_i32_1 = arith.constant 0 : i32
    return %c0_i32, %c0_i32_0 : i32, i32
  }
  func.func @transform_3(%arg0: i32, %arg1: i32) -> (i32, i32) {
    %c0_i32 = arith.constant 0 : i32
    %c0_i32_0 = arith.constant 0 : i32
    %c0_i32_1 = arith.constant 0 : i32
    return %c0_i32, %c0_i32_0 : i32, i32
  }
  func.func @transform_4(%arg0: i32, %arg1: i32) -> (i32, i32) {
    %c0_i32 = arith.constant 0 : i32
    %c0_i32_0 = arith.constant 0 : i32
    %c0_i32_1 = arith.constant 0 : i32
    return %c0_i32, %c0_i32_0 : i32, i32
  }
  func.func @transform_5(%arg0: i32, %arg1: i32) -> (i32, i32) {
    %c0_i32 = arith.constant 0 : i32
    %c0_i32_0 = arith.constant 0 : i32
    %c0_i32_1 = arith.constant 0 : i32
    return %c0_i32, %c0_i32_0 : i32, i32
  }
  func.func @transform_6(%arg0: i32, %arg1: i32) -> (i32, i32) {
    %c0_i32 = arith.constant 0 : i32
    %c0_i32_0 = arith.constant 0 : i32
    %c0_i32_1 = arith.constant 0 : i32
    return %c0_i32, %c0_i32_0 : i32, i32
  }
  func.func @transform_7(%arg0: i32, %arg1: i32) -> (i32, i32) {
    %c0_i32 = arith.constant 0 : i32
    %c0_i32_0 = arith.constant 0 : i32
    return %arg0, %c0_i32 : i32, i32
  }
}

</mosaic_0001>

<llo_original>
// kernel: tpu_custom_call.1
$region0: #{tpu_custom_call.1}
  #allocation0 [shape = 'u32[]', space=smem, size = 0x4, offset = 0x4, fixed_abs, tag = 'smem constant byte address 0x4 - core index']
  #allocation1 [shape = 'u32[144,128]{1,0:T(1,128)}', space=vmem, size = 0x12000, scoped, tag = 'internal scratch']
  #allocation2 [shape = 'f32[8,128]{1,0:T(8,128)}', space=vmem, size = 0x1000, scoped, tag = 'scratch operand']
  %s0 = inlined_call_operand.hbm [shape: f32[8,128], index: 0, kind: input, shape index: {}]
  %s1 = inlined_call_operand.hbm [shape: bf16[128,512], index: 1, kind: input, shape index: {}]
  %s2 = inlined_call_operand.vmem [shape: f32[1,512], index: 2, kind: input, shape index: {}]
  %s3 = inlined_call_operand.hbm [shape: bf16[512,128], index: 3, kind: input, shape index: {}]
  %s4 = inlined_call_operand.vmem [shape: f32[1,128], index: 4, kind: input, shape index: {}]
  %s5 = inlined_call_operand.hbm [shape: bf16[128,128], index: 5, kind: input, shape index: {}]
  %s6 = inlined_call_operand.vmem [shape: f32[1,128], index: 6, kind: input, shape index: {}]
  %s7 = inlined_call_operand.hbm [shape: f32[8,128], index: 7, kind: output, shape index: {}]
  %s8 = sld [smem:[#allocation0]]
  $region62: #{tpu_custom_call.1} parent=0
    _
  %s10 = ssub.s32 1, %s8
  %s11 = scalar_select 0, %s10, %s8
  $region1: #{tpu_custom_call.1} parent=0
    #allocation3 [shape = 'u8[4096]{0}', space=vmem, size = 0x1000, scoped, tag = 'input window, operand 0, single buffered']
    #allocation4 [shape = 's32[1]{0}', space=sflag, size = 0x4, scoped, tag = 'scoped memory for tpu_custom_call.1']
    #allocation5 [shape = 's32[1]{0}', space=sflag, size = 0x4, scoped, tag = 'scoped memory for tpu_custom_call.1']
    #allocation6 [shape = 'u8[131072]{0}', space=vmem, size = 0x20000, scoped, tag = 'input window, operand 1, single buffered']
    #allocation7 [shape = 's32[1]{0}', space=sflag, size = 0x4, scoped, tag = 'scoped memory for tpu_custom_call.1']
    #allocation8 [shape = 'u8[131072]{0}', space=vmem, size = 0x20000, scoped, tag = 'input window, operand 3, single buffered']
    #allocation9 [shape = 'u8[32768]{0}', space=vmem, size = 0x8000, scoped, tag = 'input window, operand 5, single buffered']
    #allocation10 [shape = 's32[1]{0}', space=sflag, size = 0x4, scoped, tag = 'scoped memory for tpu_custom_call.1']
    #allocation11 [shape = 'u8[4096]{0}', space=vmem, size = 0x1000, scoped, tag = 'output window, operand 0, single buffered']
    %12 = vsyncpa [#allocation4], 0
    %13 = vsyncpa [#allocation7], 0
    %14 = vsyncpa [#allocation10], 0
    %15 = vsyncpa [#allocation5], 0
    // Predicated region
    $region2: #{tpu_custom_call.1} parent=1 // pred_check
      _
    $region3: #{tpu_custom_call.1} parent=1 // pred_check_branch
      %17 = sbr.rel (0) target = $region5
    $region4: #{tpu_custom_call.1} parent=1 // pred_region
      %s18 = sadd.s32 0, 0
      %s20 = ssub.s32 128, 128
      %21 = vsyncadd [#allocation4], %s20
      %s22 = smul.addr %s18, 128
      %s23 = scalar_lea.hbm %s0, %s22
      %s25 = sshll.u32 [#allocation3], 4
      %s26 = int_to_ptr.vmem [resolvable:$true] %s25
      %28 = dma.hbm_to_vmem [thread:$0]  %s23, 128, %s26, [#allocation4]
    $region5: #{tpu_custom_call.1} parent=1 // pred_fallthru
      _
    // Predicated region
    $region6: #{tpu_custom_call.1} parent=1 // pred_check
      _
    $region7: #{tpu_custom_call.1} parent=1 // pred_check_branch
      %30 = sbr.rel (0) target = $region9
    $region8: #{tpu_custom_call.1} parent=1 // pred_region
      %s32 = ssub.s32 4096, 4096
      %33 = vsyncadd [#allocation7], %s32
      %s34 = sshll.u32 [#allocation6], 4
      %s35 = int_to_ptr.vmem [resolvable:$true] %s34
      %40 = dma.hbm_to_vmem [thread:$0]  %s1, 4096, %s35, [#allocation7], 256, 256, 16
    $region9: #{tpu_custom_call.1} parent=1 // pred_fallthru
      _
    // Predicated region
    $region10: #{tpu_custom_call.1} parent=1 // pred_check
      _
    $region11: #{tpu_custom_call.1} parent=1 // pred_check_branch
      %42 = sbr.rel (0) target = $region13
    $region12: #{tpu_custom_call.1} parent=1 // pred_region
      _
    $region13: #{tpu_custom_call.1} parent=1 // pred_fallthru
      _
    // Predicated region
    $region14: #{tpu_custom_call.1} parent=1 // pred_check
      _
    $region15: #{tpu_custom_call.1} parent=1 // pred_check_branch
      %44 = sbr.rel (0) target = $region17
    $region16: #{tpu_custom_call.1} parent=1 // pred_region
      %s46 = ssub.s32 4096, 4096
      %47 = vsyncadd [#allocation7], %s46
      %s48 = sshll.u32 [#allocation8], 4
      %s49 = int_to_ptr.vmem [resolvable:$true] %s48
      %54 = dma.hbm_to_vmem [thread:$0]  %s3, 4096, %s49, [#allocation7], 64, 64, 4
    $region17: #{tpu_custom_call.1} parent=1 // pred_fallthru
      _
    // Predicated region
    $region18: #{tpu_custom_call.1} parent=1 // pred_check
      _
    $region19: #{tpu_custom_call.1} parent=1 // pred_check_branch
      %56 = sbr.rel (0) target = $region21
    $region20: #{tpu_custom_call.1} parent=1 // pred_region
      _
    $region21: #{tpu_custom_call.1} parent=1 // pred_fallthru
      _
    // Predicated region
    $region22: #{tpu_custom_call.1} parent=1 // pred_check
      _
    $region23: #{tpu_custom_call.1} parent=1 // pred_check_branch
      %58 = sbr.rel (0) target = $region25
    $region24: #{tpu_custom_call.1} parent=1 // pred_region
      %s60 = ssub.s32 1024, 1024
      %61 = vsyncadd [#allocation10], %s60
      %s62 = sshll.u32 [#allocation9], 4
      %s63 = int_to_ptr.vmem [resolvable:$true] %s62
      %68 = dma.hbm_to_vmem [thread:$0]  %s5, 1024, %s63, [#allocation10], 64, 64, 4
    $region25: #{tpu_custom_call.1} parent=1 // pred_fallthru
      _
    // Predicated region
    $region26: #{tpu_custom_call.1} parent=1 // pred_check
      _
    $region27: #{tpu_custom_call.1} parent=1 // pred_check_branch
      %70 = sbr.rel (0) target = $region29
    $region28: #{tpu_custom_call.1} parent=1 // pred_region
      _
    $region29: #{tpu_custom_call.1} parent=1 // pred_fallthru
      _
    // Predicated region
    $region30: #{tpu_custom_call.1} parent=1 // pred_check
      _
    $region31: #{tpu_custom_call.1} parent=1 // pred_check_branch
      %72 = sbr.rel (0) target = $region33
    $region32: #{tpu_custom_call.1} parent=1 // pred_region
      %73 = dma.done [#allocation4], 128
    $region33: #{tpu_custom_call.1} parent=1 // pred_fallthru
      _
    // Predicated region
    $region34: #{tpu_custom_call.1} parent=1 // pred_check
      _
    $region35: #{tpu_custom_call.1} parent=1 // pred_check_branch
      %75 = sbr.rel (0) target = $region37
    $region36: #{tpu_custom_call.1} parent=1 // pred_region
      %76 = dma.done [#allocation7], 4096
    $region37: #{tpu_custom_call.1} parent=1 // pred_fallthru
      _
    // Predicated region
    $region38: #{tpu_custom_call.1} parent=1 // pred_check
      _
    $region39: #{tpu_custom_call.1} parent=1 // pred_check_branch
      %78 = sbr.rel (0) target = $region41
    $region40: #{tpu_custom_call.1} parent=1 // pred_region
      %79 = dma.done [#allocation7], 4096
    $region41: #{tpu_custom_call.1} parent=1 // pred_fallthru
      _
    // Predicated region
    $region42: #{tpu_custom_call.1} parent=1 // pred_check
      _
    $region43: #{tpu_custom_call.1} parent=1 // pred_check_branch
      %81 = sbr.rel (0) target = $region45
    $region44: #{tpu_custom_call.1} parent=1 // pred_region
      %82 = dma.done [#allocation10], 1024
    $region45: #{tpu_custom_call.1} parent=1 // pred_fallthru
      _
    %s83 = sadd.s32 0, 0
    %p85 = scmp.eq.s32.totalorder 0, 0
    // Predicated region
    $region46: #{tpu_custom_call.1} parent=1 // pred_check
      %p86 = pneg %p85
    $region47: #{tpu_custom_call.1} parent=1 // pred_check_branch
      %88 = sbr.rel (%p86) target = $region49
    $region48: #{tpu_custom_call.1} parent=1 // pred_region
      %89 = vst [vmem:[#allocation2] sm:$0xff] 0.0
    $region49: #{tpu_custom_call.1} parent=1 // pred_fallthru
      _
    %v90 = vld [vmem:[#allocation3] sm:$0xff]
    %v91 = vpack.c.bf16 %v90, %v90
    %v92 = vld [vmem:[#allocation6] sm:$0xff]
    %v93 = vld [vmem:[#allocation6 + $0x8] sm:$0xff]
    %v94 = vld [vmem:[#allocation6 + $0x10] sm:$0xff]
    %v95 = vld [vmem:[#allocation6 + $0x18] sm:$0xff]
    %v96 = vld [vmem:[#allocation6 + $0x20] sm:$0xff]
    %v97 = vld [vmem:[#allocation6 + $0x28] sm:$0xff]
    %v98 = vld [vmem:[#allocation6 + $0x30] sm:$0xff]
    %v99 = vld [vmem:[#allocation6 + $0x38] sm:$0xff]
    %v100 = vld [vmem:[#allocation6 + $0x40] sm:$0xff]
    %v101 = vld [vmem:[#allocation6 + $0x48] sm:$0xff]
    %v102 = vld [vmem:[#allocation6 + $0x50] sm:$0xff]
    %v103 = vld [vmem:[#allocation6 + $0x58] sm:$0xff]
    %v104 = vld [vmem:[#allocation6 + $0x60] sm:$0xff]
    %v105 = vld [vmem:[#allocation6 + $0x68] sm:$0xff]
    %v106 = vld [vmem:[#allocation6 + $0x70] sm:$0xff]
    %v107 = vld [vmem:[#allocation6 + $0x78] sm:$0xff]
    %v108 = vld [vmem:[#allocation6 + $0x80] sm:$0xff]
    %v109 = vld [vmem:[#allocation6 + $0x88] sm:$0xff]
    %v110 = vld [vmem:[#allocation6 + $0x90] sm:$0xff]
    %v111 = vld [vmem:[#allocation6 + $0x98] sm:$0xff]
    %v112 = vld [vmem:[#allocation6 + $0xa0] sm:$0xff]
    %v113 = vld [vmem:[#allocation6 + $0xa8] sm:$0xff]
    %v114 = vld [vmem:[#allocation6 + $0xb0] sm:$0xff]
    %v115 = vld [vmem:[#allocation6 + $0xb8] sm:$0xff]
    %v116 = vld [vmem:[#allocation6 + $0xc0] sm:$0xff]
    %v117 = vld [vmem:[#allocation6 + $0xc8] sm:$0xff]
    %v118 = vld [vmem:[#allocation6 + $0xd0] sm:$0xff]
    %v119 = vld [vmem:[#allocation6 + $0xd8] sm:$0xff]
    %v120 = vld [vmem:[#allocation6 + $0xe0] sm:$0xff]
    %v121 = vld [vmem:[#allocation6 + $0xe8] sm:$0xff]
    %v122 = vld [vmem:[#allocation6 + $0xf0] sm:$0xff]
    %v123 = vld [vmem:[#allocation6 + $0xf8] sm:$0xff]
    %v124 = vld [vmem:[%s2] sm:$0xf]
    %v126 = vlaneseq
    %v127 = vshrl.u32 %v126, 7
    %v128 = vsub.s32 0, %v127
    %v129 = vrot.slane %v124, %v128
    %v130 = vlaneseq
    %v131 = vshrl.u32 %v130, 7
    %v132 = vsub.s32 1, %v131
    %v133 = vrot.slane %v124, %v132
    %v134 = vlaneseq
    %v135 = vshrl.u32 %v134, 7
    %v136 = vsub.s32 2, %v135
    %v137 = vrot.slane %v124, %v136
    %v138 = vlaneseq
    %v139 = vshrl.u32 %v138, 7
    %v140 = vsub.s32 3, %v139
    %v141 = vrot.slane %v124, %v140
    %v178 = vunpack.c.l.b16 %v92
    %v179 = vunpack.c.h.b16 %v92
    %v180 = vunpack.c.l.b16 %v93
    %v181 = vunpack.c.h.b16 %v93
    %v182 = vunpack.c.l.b16 %v94
    %v183 = vunpack.c.h.b16 %v94
    %v184 = vunpack.c.l.b16 %v95
    %v185 = vunpack.c.h.b16 %v95
    %v186 = vunpack.c.l.b16 %v96
    %v187 = vunpack.c.h.b16 %v96
    %v188 = vunpack.c.l.b16 %v97
    %v189 = vunpack.c.h.b16 %v97
    %v190 = vunpack.c.l.b16 %v98
    %v191 = vunpack.c.h.b16 %v98
    %v192 = vunpack.c.l.b16 %v99
    %v193 = vunpack.c.h.b16 %v99
    %v194 = vunpack.c.l.b16 %v100
    %v195 = vunpack.c.h.b16 %v100
    %v196 = vunpack.c.l.b16 %v101
    %v197 = vunpack.c.h.b16 %v101
    %v198 = vunpack.c.l.b16 %v102
    %v199 = vunpack.c.h.b16 %v102
    %v200 = vunpack.c.l.b16 %v103
    %v201 = vunpack.c.h.b16 %v103
    %v202 = vunpack.c.l.b16 %v104
    %v203 = vunpack.c.h.b16 %v104
    %v204 = vunpack.c.l.b16 %v105
    %v205 = vunpack.c.h.b16 %v105
    %v206 = vunpack.c.l.b16 %v106
    %v207 = vunpack.c.h.b16 %v106
    %v208 = vunpack.c.l.b16 %v107
    %v209 = vunpack.c.h.b16 %v107
    %v210 = vunpack.c.l.b16 %v108
    %v211 = vunpack.c.h.b16 %v108
    %v212 = vunpack.c.l.b16 %v109
    %v213 = vunpack.c.h.b16 %v109
    %v214 = vunpack.c.l.b16 %v110
    %v215 = vunpack.c.h.b16 %v110
    %v216 = vunpack.c.l.b16 %v111
    %v217 = vunpack.c.h.b16 %v111
    %v218 = vunpack.c.l.b16 %v112
    %v219 = vunpack.c.h.b16 %v112
    %v220 = vunpack.c.l.b16 %v113
    %v221 = vunpack.c.h.b16 %v113
    %v222 = vunpack.c.l.b16 %v114
    %v223 = vunpack.c.h.b16 %v114
    %v224 = vunpack.c.l.b16 %v115
    %v225 = vunpack.c.h.b16 %v115
    %v226 = vunpack.c.l.b16 %v116
    %v227 = vunpack.c.h.b16 %v116
    %v228 = vunpack.c.l.b16 %v117
    %v229 = vunpack.c.h.b16 %v117
    %v230 = vunpack.c.l.b16 %v118
    %v231 = vunpack.c.h.b16 %v118
    %v232 = vunpack.c.l.b16 %v119
    %v233 = vunpack.c.h.b16 %v119
    %v234 = vunpack.c.l.b16 %v120
    %v235 = vunpack.c.h.b16 %v120
    %v236 = vunpack.c.l.b16 %v121
    %v237 = vunpack.c.h.b16 %v121
    %v238 = vunpack.c.l.b16 %v122
    %v239 = vunpack.c.h.b16 %v122
    %v240 = vunpack.c.l.b16 %v123
    %v241 = vunpack.c.h.b16 %v123
    %v242 = vpack.c.b16 %v182, %v178
    %v243 = vpack.c.b16 %v183, %v179
    %v244 = vpack.c.b16 %v184, %v180
    %v245 = vpack.c.b16 %v185, %v181
    %v246 = vpack.c.b16 %v190, %v186
    %v247 = vpack.c.b16 %v191, %v187
    %v248 = vpack.c.b16 %v192, %v188
    %v249 = vpack.c.b16 %v193, %v189
    %v250 = vpack.c.b16 %v198, %v194
    %v251 = vpack.c.b16 %v199, %v195
    %v252 = vpack.c.b16 %v200, %v196
    %v253 = vpack.c.b16 %v201, %v197
    %v254 = vpack.c.b16 %v206, %v202
    %v255 = vpack.c.b16 %v207, %v203
    %v256 = vpack.c.b16 %v208, %v204
    %v257 = vpack.c.b16 %v209, %v205
    %v258 = vpack.c.b16 %v214, %v210
    %v259 = vpack.c.b16 %v215, %v211
    %v260 = vpack.c.b16 %v216, %v212
    %v261 = vpack.c.b16 %v217, %v213
    %v262 = vpack.c.b16 %v222, %v218
    %v263 = vpack.c.b16 %v223, %v219
    %v264 = vpack.c.b16 %v224, %v220
    %v265 = vpack.c.b16 %v225, %v221
    %v266 = vpack.c.b16 %v230, %v226
    %v267 = vpack.c.b16 %v231, %v227
    %v268 = vpack.c.b16 %v232, %v228
    %v269 = vpack.c.b16 %v233, %v229
    %v270 = vpack.c.b16 %v238, %v234
    %v271 = vpack.c.b16 %v239, %v235
    %v272 = vpack.c.b16 %v240, %v236
    %v273 = vpack.c.b16 %v241, %v237
    %306 = vmatprep.subr.bf16.mxu0 %v243
    %307 = vmatpush1.bf16.msra.mxu0 %v242
    %308 = vmatprep.subr.bf16.mxu0 %v247
    %309 = vmatpush1.bf16.msra.mxu0 %v246
    %310 = vmatprep.subr.bf16.mxu0 %v251
    %311 = vmatpush1.bf16.msra.mxu0 %v250
    %312 = vmatprep.subr.bf16.mxu0 %v255
    %313 = vmatpush1.bf16.msra.mxu0 %v254
    %314 = vmatprep.subr.bf16.mxu0 %v259
    %315 = vmatpush1.bf16.msra.mxu0 %v258
    %316 = vmatprep.subr.bf16.mxu0 %v263
    %317 = vmatpush1.bf16.msra.mxu0 %v262
    %318 = vmatprep.subr.bf16.mxu0 %v267
    %319 = vmatpush1.bf16.msra.mxu0 %v266
    %320 = vmatprep.subr.bf16.mxu0 %v271
    %321 = vmatpush1.bf16.msra.mxu0 %v270
    %322 = vmatprep.subr.bf16.mxu0 0
    %323 = vmatpush1.bf16.msra.mxu0 0
    %324 = vmatprep.subr.bf16.mxu0 0
    %325 = vmatpush1.bf16.msra.mxu0 0
    %326 = vmatprep.subr.bf16.mxu0 0
    %327 = vmatpush1.bf16.msra.mxu0 0
    %328 = vmatprep.subr.bf16.mxu0 0
    %329 = vmatpush1.bf16.msra.mxu0 0
    %330 = vmatprep.subr.bf16.mxu0 0
    %331 = vmatpush1.bf16.msra.mxu0 0
    %332 = vmatprep.subr.bf16.mxu0 0
    %333 = vmatpush1.bf16.msra.mxu0 0
    %334 = vmatprep.subr.bf16.mxu0 0
    %335 = vmatpush1.bf16.msra.mxu0 0
    %336 = vmatprep.subr.bf16.mxu0 0
    %337 = vmatpush1.bf16.msra.mxu0 0
    %338 = vmatprep.mubr.bf16.mxu0 0
    %339 = vmatmul.mubr.bf16.gmra.mrb[0].mxu0 %v91
    %v340 = vpop.f32.mrb[0].mxu0
    %v341 = vadd.f32 %v129, %v340
    %v342 = vpop.f32.mrb[0].mxu0
    %v343 = vadd.f32 %v133, %v342
    %v344 = vpop.f32.mrb[0].mxu0
    %v345 = vpop.f32.mrb[0].mxu0
    %346 = vdwg.mxu0
    %347 = vmatprep.subr.bf16.mxu0 %v245
    %348 = vmatpush1.bf16.msra.mxu0 %v244
    %349 = vmatprep.subr.bf16.mxu0 %v249
    %350 = vmatpush1.bf16.msra.mxu0 %v248
    %351 = vmatprep.subr.bf16.mxu0 %v253
    %352 = vmatpush1.bf16.msra.mxu0 %v252
    %353 = vmatprep.subr.bf16.mxu0 %v257
    %354 = vmatpush1.bf16.msra.mxu0 %v256
    %355 = vmatprep.subr.bf16.mxu0 %v261
    %356 = vmatpush1.bf16.msra.mxu0 %v260
    %357 = vmatprep.subr.bf16.mxu0 %v265
    %358 = vmatpush1.bf16.msra.mxu0 %v264
    %359 = vmatprep.subr.bf16.mxu0 %v269
    %360 = vmatpush1.bf16.msra.mxu0 %v268
    %361 = vmatprep.subr.bf16.mxu0 %v273
    %362 = vmatpush1.bf16.msra.mxu0 %v272
    %363 = vmatprep.subr.bf16.mxu0 0
    %364 = vmatpush1.bf16.msra.mxu0 0
    %365 = vmatprep.subr.bf16.mxu0 0
    %366 = vmatpush1.bf16.msra.mxu0 0
    %367 = vmatprep.subr.bf16.mxu0 0
    %368 = vmatpush1.bf16.msra.mxu0 0
    %369 = vmatprep.subr.bf16.mxu0 0
    %370 = vmatpush1.bf16.msra.mxu0 0
    %371 = vmatprep.subr.bf16.mxu0 0
    %372 = vmatpush1.bf16.msra.mxu0 0
    %373 = vmatprep.subr.bf16.mxu0 0
    %374 = vmatpush1.bf16.msra.mxu0 0
    %375 = vmatprep.subr.bf16.mxu0 0
    %376 = vmatpush1.bf16.msra.mxu0 0
    %377 = vmatprep.subr.bf16.mxu0 0
    %378 = vmatpush1.bf16.msra.mxu0 0
    %379 = vmatprep.mubr.bf16.mxu0 0
    %380 = vmatmul.mubr.bf16.gmra.mrb[0].mxu0 %v91
    %v381 = vpop.f32.mrb[0].mxu0
    %v382 = vadd.f32 %v137, %v381
    %v383 = vpop.f32.mrb[0].mxu0
    %v384 = vadd.f32 %v141, %v383
    %v385 = vpop.f32.mrb[0].mxu0
    %v386 = vpop.f32.mrb[0].mxu0
    %387 = vdwg.mxu0
    %v388 = vmax.f32 %v341, 0.0
    %v389 = vmax.f32 %v343, 0.0
    %v390 = vmax.f32 %v382, 0.0
    %v391 = vmax.f32 %v384, 0.0
    %v392 = vpack.c.bf16 %v388, %v388
    %v393 = vpack.c.bf16 %v389, %v389
    %v394 = vpack.c.bf16 %v390, %v390
    %v395 = vpack.c.bf16 %v391, %v391
    %v396 = vld [vmem:[#allocation8] sm:$0xf]
    %v397 = vld [vmem:[#allocation8 + $0x4] sm:$0xf]
    %v398 = vld [vmem:[#allocation8 + $0x8] sm:$0xf]
    %v399 = vld [vmem:[#allocation8 + $0xc] sm:$0xf]
    %v400 = vld [vmem:[#allocation8 + $0x10] sm:$0xf]
    %v401 = vld [vmem:[#allocation8 + $0x14] sm:$0xf]
    %v402 = vld [vmem:[#allocation8 + $0x18] sm:$0xf]
    %v403 = vld [vmem:[#allocation8 + $0x1c] sm:$0xf]
    %v404 = vld [vmem:[#allocation8 + $0x20] sm:$0xf]
    %v405 = vld [vmem:[#allocation8 + $0x24] sm:$0xf]
    %v406 = vld [vmem:[#allocation8 + $0x28] sm:$0xf]
    %v407 = vld [vmem:[#allocation8 + $0x2c] sm:$0xf]
    %v408 = vld [vmem:[#allocation8 + $0x30] sm:$0xf]
    %v409 = vld [vmem:[#allocation8 + $0x34] sm:$0xf]
    %v410 = vld [vmem:[#allocation8 + $0x38] sm:$0xf]
    %v411 = vld [vmem:[#allocation8 + $0x3c] sm:$0xf]
    %v412 = vld [vmem:[#allocation8 + $0x40] sm:$0xf]
    %v413 = vld [vmem:[#allocation8 + $0x44] sm:$0xf]
    %v414 = vld [vmem:[#allocation8 + $0x48] sm:$0xf]
    %v415 = vld [vmem:[#allocation8 + $0x4c] sm:$0xf]
    %v416 = vld [vmem:[#allocation8 + $0x50] sm:$0xf]
    %v417 = vld [vmem:[#allocation8 + $0x54] sm:$0xf]
    %v418 = vld [vmem:[#allocation8 + $0x58] sm:$0xf]
    %v419 = vld [vmem:[#allocation8 + $0x5c] sm:$0xf]
    %v420 = vld [vmem:[#allocation8 + $0x60] sm:$0xf]
    %v421 = vld [vmem:[#allocation8 + $0x64] sm:$0xf]
    %v422 = vld [vmem:[#allocation8 + $0x68] sm:$0xf]
    %v423 = vld [vmem:[#allocation8 + $0x6c] sm:$0xf]
    %v424 = vld [vmem:[#allocation8 + $0x70] sm:$0xf]
    %v425 = vld [vmem:[#allocation8 + $0x74] sm:$0xf]
    %v426 = vld [vmem:[#allocation8 + $0x78] sm:$0xf]
    %v427 = vld [vmem:[#allocation8 + $0x7c] sm:$0xf]
    %v428 = vld [vmem:[#allocation8 + $0x80] sm:$0xf]
    %v429 = vld [vmem:[#allocation8 + $0x84] sm:$0xf]
    %v430 = vld [vmem:[#allocation8 + $0x88] sm:$0xf]
    %v431 = vld [vmem:[#allocation8 + $0x8c] sm:$0xf]
    %v432 = vld [vmem:[#allocation8 + $0x90] sm:$0xf]
    %v433 = vld [vmem:[#allocation8 + $0x94] sm:$0xf]
    %v434 = vld [vmem:[#allocation8 + $0x98] sm:$0xf]
    %v435 = vld [vmem:[#allocation8 + $0x9c] sm:$0xf]
    %v436 = vld [vmem:[#allocation8 + $0xa0] sm:$0xf]
    %v437 = vld [vmem:[#allocation8 + $0xa4] sm:$0xf]
    %v438 = vld [vmem:[#allocation8 + $0xa8] sm:$0xf]
    %v439 = vld [vmem:[#allocation8 + $0xac] sm:$0xf]
    %v440 = vld [vmem:[#allocation8 + $0xb0] sm:$0xf]
    %v441 = vld [vmem:[#allocation8 + $0xb4] sm:$0xf]
    %v442 = vld [vmem:[#allocation8 + $0xb8] sm:$0xf]
    %v443 = vld [vmem:[#allocation8 + $0xbc] sm:$0xf]
    %v444 = vld [vmem:[#allocation8 + $0xc0] sm:$0xf]
    %v445 = vld [vmem:[#allocation8 + $0xc4] sm:$0xf]
    %v446 = vld [vmem:[#allocation8 + $0xc8] sm:$0xf]
    %v447 = vld [vmem:[#allocation8 + $0xcc] sm:$0xf]
    %v448 = vld [vmem:[#allocation8 + $0xd0] sm:$0xf]
    %v449 = vld [vmem:[#allocation8 + $0xd4] sm:$0xf]
    %v450 = vld [vmem:[#allocation8 + $0xd8] sm:$0xf]
    %v451 = vld [vmem:[#allocation8 + $0xdc] sm:$0xf]
    %v452 = vld [vmem:[#allocation8 + $0xe0] sm:$0xf]
    %v453 = vld [vmem:[#allocation8 + $0xe4] sm:$0xf]
    %v454 = vld [vmem:[#allocation8 + $0xe8] sm:$0xf]
    %v455 = vld [vmem:[#allocation8 + $0xec] sm:$0xf]
    %v456 = vld [vmem:[#allocation8 + $0xf0] sm:$0xf]
    %v457 = vld [vmem:[#allocation8 + $0xf4] sm:$0xf]
    %v458 = vld [vmem:[#allocation8 + $0xf8] sm:$0xf]
    %v459 = vld [vmem:[#allocation8 + $0xfc] sm:$0xf]
    %v460 = vld [vmem:[%s4] sm:$0x1]
    %v462 = vlaneseq
    %v463 = vshrl.u32 %v462, 7
    %v464 = vsub.s32 0, %v463
    %v465 = vrot.slane %v460, %v464
    %v531 = vunpack.c.l.b16 %v396
    %v532 = vunpack.c.l.b16 %v397
    %v533 = vunpack.c.l.b16 %v398
    %v534 = vunpack.c.l.b16 %v399
    %v535 = vunpack.c.l.b16 %v400
    %v536 = vunpack.c.l.b16 %v401
    %v537 = vunpack.c.l.b16 %v402
    %v538 = vunpack.c.l.b16 %v403
    %v539 = vunpack.c.l.b16 %v404
    %v540 = vunpack.c.l.b16 %v405
    %v541 = vunpack.c.l.b16 %v406
    %v542 = vunpack.c.l.b16 %v407
    %v543 = vunpack.c.l.b16 %v408
    %v544 = vunpack.c.l.b16 %v409
    %v545 = vunpack.c.l.b16 %v410
    %v546 = vunpack.c.l.b16 %v411
    %v547 = vunpack.c.l.b16 %v412
    %v548 = vunpack.c.l.b16 %v413
    %v549 = vunpack.c.l.b16 %v414
    %v550 = vunpack.c.l.b16 %v415
    %v551 = vunpack.c.l.b16 %v416
    %v552 = vunpack.c.l.b16 %v417
    %v553 = vunpack.c.l.b16 %v418
    %v554 = vunpack.c.l.b16 %v419
    %v555 = vunpack.c.l.b16 %v420
    %v556 = vunpack.c.l.b16 %v421
    %v557 = vunpack.c.l.b16 %v422
    %v558 = vunpack.c.l.b16 %v423
    %v559 = vunpack.c.l.b16 %v424
    %v560 = vunpack.c.l.b16 %v425
    %v561 = vunpack.c.l.b16 %v426
    %v562 = vunpack.c.l.b16 %v427
    %v563 = vunpack.c.l.b16 %v428
    %v564 = vunpack.c.l.b16 %v429
    %v565 = vunpack.c.l.b16 %v430
    %v566 = vunpack.c.l.b16 %v431
    %v567 = vunpack.c.l.b16 %v432
    %v568 = vunpack.c.l.b16 %v433
    %v569 = vunpack.c.l.b16 %v434
    %v570 = vunpack.c.l.b16 %v435
    %v571 = vunpack.c.l.b16 %v436
    %v572 = vunpack.c.l.b16 %v437
    %v573 = vunpack.c.l.b16 %v438
    %v574 = vunpack.c.l.b16 %v439
    %v575 = vunpack.c.l.b16 %v440
    %v576 = vunpack.c.l.b16 %v441
    %v577 = vunpack.c.l.b16 %v442
    %v578 = vunpack.c.l.b16 %v443
    %v579 = vunpack.c.l.b16 %v444
    %v580 = vunpack.c.l.b16 %v445
    %v581 = vunpack.c.l.b16 %v446
    %v582 = vunpack.c.l.b16 %v447
    %v583 = vunpack.c.l.b16 %v448
    %v584 = vunpack.c.l.b16 %v449
    %v585 = vunpack.c.l.b16 %v450
    %v586 = vunpack.c.l.b16 %v451
    %v587 = vunpack.c.l.b16 %v452
    %v588 = vunpack.c.l.b16 %v453
    %v589 = vunpack.c.l.b16 %v454
    %v590 = vunpack.c.l.b16 %v455
    %v591 = vunpack.c.l.b16 %v456
    %v592 = vunpack.c.l.b16 %v457
    %v593 = vunpack.c.l.b16 %v458
    %v594 = vunpack.c.l.b16 %v459
    %v595 = vpack.c.b16 %v532, %v531
    %v596 = vpack.c.b16 %v534, %v533
    %v597 = vpack.c.b16 %v536, %v535
    %v598 = vpack.c.b16 %v538, %v537
    %v599 = vpack.c.b16 %v540, %v539
    %v600 = vpack.c.b16 %v542, %v541
    %v601 = vpack.c.b16 %v544, %v543
    %v602 = vpack.c.b16 %v546, %v545
    %v603 = vpack.c.b16 %v548, %v547
    %v604 = vpack.c.b16 %v550, %v549
    %v605 = vpack.c.b16 %v552, %v551
    %v606 = vpack.c.b16 %v554, %v553
    %v607 = vpack.c.b16 %v556, %v555
    %v608 = vpack.c.b16 %v558, %v557
    %v609 = vpack.c.b16 %v560, %v559
    %v610 = vpack.c.b16 %v562, %v561
    %v611 = vpack.c.b16 %v564, %v563
    %v612 = vpack.c.b16 %v566, %v565
    %v613 = vpack.c.b16 %v568, %v567
    %v614 = vpack.c.b16 %v570, %v569
    %v615 = vpack.c.b16 %v572, %v571
    %v616 = vpack.c.b16 %v574, %v573
    %v617 = vpack.c.b16 %v576, %v575
    %v618 = vpack.c.b16 %v578, %v577
    %v619 = vpack.c.b16 %v580, %v579
    %v620 = vpack.c.b16 %v582, %v581
    %v621 = vpack.c.b16 %v584, %v583
    %v622 = vpack.c.b16 %v586, %v585
    %v623 = vpack.c.b16 %v588, %v587
    %v624 = vpack.c.b16 %v590, %v589
    %v625 = vpack.c.b16 %v592, %v591
    %v626 = vpack.c.b16 %v594, %v593
    %659 = vmatprep.subr.bf16.mxu0 0
    %660 = vmatpush1.bf16.msra.mxu0 %v595
    %661 = vmatprep.subr.bf16.mxu0 0
    %662 = vmatpush1.bf16.msra.mxu0 %v596
    %663 = vmatprep.subr.bf16.mxu0 0
    %664 = vmatpush1.bf16.msra.mxu0 %v597
    %665 = vmatprep.subr.bf16.mxu0 0
    %666 = vmatpush1.bf16.msra.mxu0 %v598
    %667 = vmatprep.subr.bf16.mxu0 0
    %668 = vmatpush1.bf16.msra.mxu0 %v599
    %669 = vmatprep.subr.bf16.mxu0 0
    %670 = vmatpush1.bf16.msra.mxu0 %v600
    %671 = vmatprep.subr.bf16.mxu0 0
    %672 = vmatpush1.bf16.msra.mxu0 %v601
    %673 = vmatprep.subr.bf16.mxu0 0
    %674 = vmatpush1.bf16.msra.mxu0 %v602
    %675 = vmatprep.subr.bf16.mxu0 0
    %676 = vmatpush1.bf16.msra.mxu0 %v603
    %677 = vmatprep.subr.bf16.mxu0 0
    %678 = vmatpush1.bf16.msra.mxu0 %v604
    %679 = vmatprep.subr.bf16.mxu0 0
    %680 = vmatpush1.bf16.msra.mxu0 %v605
    %681 = vmatprep.subr.bf16.mxu0 0
    %682 = vmatpush1.bf16.msra.mxu0 %v606
    %683 = vmatprep.subr.bf16.mxu0 0
    %684 = vmatpush1.bf16.msra.mxu0 %v607
    %685 = vmatprep.subr.bf16.mxu0 0
    %686 = vmatpush1.bf16.msra.mxu0 %v608
    %687 = vmatprep.subr.bf16.mxu0 0
    %688 = vmatpush1.bf16.msra.mxu0 %v609
    %689 = vmatprep.subr.bf16.mxu0 0
    %690 = vmatpush1.bf16.msra.mxu0 %v610
    %691 = vmatprep.mubr.bf16.mxu0 %v393
    %692 = vmatmul.mubr.bf16.gmra.mrb[0].mxu0 %v392
    %v693 = vpop.f32.mrb[0].mxu0
    %v694 = vadd.f32 %v465, %v693
    %v695 = vpop.f32.mrb[0].mxu0
    %v696 = vpop.f32.mrb[0].mxu0
    %v697 = vpop.f32.mrb[0].mxu0
    %698 = vdwg.mxu0
    %699 = vmatprep.subr.bf16.mxu0 0
    %700 = vmatpush1.bf16.msra.mxu0 %v611
    %701 = vmatprep.subr.bf16.mxu0 0
    %702 = vmatpush1.bf16.msra.mxu0 %v612
    %703 = vmatprep.subr.bf16.mxu0 0
    %704 = vmatpush1.bf16.msra.mxu0 %v613
    %705 = vmatprep.subr.bf16.mxu0 0
    %706 = vmatpush1.bf16.msra.mxu0 %v614
    %707 = vmatprep.subr.bf16.mxu0 0
    %708 = vmatpush1.bf16.msra.mxu0 %v615
    %709 = vmatprep.subr.bf16.mxu0 0
    %710 = vmatpush1.bf16.msra.mxu0 %v616
    %711 = vmatprep.subr.bf16.mxu0 0
    %712 = vmatpush1.bf16.msra.mxu0 %v617
    %713 = vmatprep.subr.bf16.mxu0 0
    %714 = vmatpush1.bf16.msra.mxu0 %v618
    %715 = vmatprep.subr.bf16.mxu0 0
    %716 = vmatpush1.bf16.msra.mxu0 %v619
    %717 = vmatprep.subr.bf16.mxu0 0
    %718 = vmatpush1.bf16.msra.mxu0 %v620
    %719 = vmatprep.subr.bf16.mxu0 0
    %720 = vmatpush1.bf16.msra.mxu0 %v621
    %721 = vmatprep.subr.bf16.mxu0 0
    %722 = vmatpush1.bf16.msra.mxu0 %v622
    %723 = vmatprep.subr.bf16.mxu0 0
    %724 = vmatpush1.bf16.msra.mxu0 %v623
    %725 = vmatprep.subr.bf16.mxu0 0
    %726 = vmatpush1.bf16.msra.mxu0 %v624
    %727 = vmatprep.subr.bf16.mxu0 0
    %728 = vmatpush1.bf16.msra.mxu0 %v625
    %729 = vmatprep.subr.bf16.mxu0 0
    %730 = vmatpush1.bf16.msra.mxu0 %v626
    %731 = vmatprep.mubr.bf16.mxu0 %v395
    %732 = vmatmul.mubr.bf16.gmra.mrb[0].mxu0 %v394
    %v733 = vpop.f32.mrb[0].mxu0
    %v734 = vadd.f32 %v694, %v733
    %v735 = vpop.f32.mrb[0].mxu0
    %v736 = vpop.f32.mrb[0].mxu0
    %v737 = vpop.f32.mrb[0].mxu0
    %738 = vdwg.mxu0
    %v739 = vmax.f32 %v734, 0.0
    %v740 = vpack.c.bf16 %v739, %v739
    %v741 = vld [vmem:[#allocation9] sm:$0xf]
    %v742 = vld [vmem:[#allocation9 + $0x4] sm:$0xf]
    %v743 = vld [vmem:[#allocation9 + $0x8] sm:$0xf]
    %v744 = vld [vmem:[#allocation9 + $0xc] sm:$0xf]
    %v745 = vld [vmem:[#allocation9 + $0x10] sm:$0xf]
    %v746 = vld [vmem:[#allocation9 + $0x14] sm:$0xf]
    %v747 = vld [vmem:[#allocation9 + $0x18] sm:$0xf]
    %v748 = vld [vmem:[#allocation9 + $0x1c] sm:$0xf]
    %v749 = vld [vmem:[#allocation9 + $0x20] sm:$0xf]
    %v750 = vld [vmem:[#allocation9 + $0x24] sm:$0xf]
    %v751 = vld [vmem:[#allocation9 + $0x28] sm:$0xf]
    %v752 = vld [vmem:[#allocation9 + $0x2c] sm:$0xf]
    %v753 = vld [vmem:[#allocation9 + $0x30] sm:$0xf]
    %v754 = vld [vmem:[#allocation9 + $0x34] sm:$0xf]
    %v755 = vld [vmem:[#allocation9 + $0x38] sm:$0xf]
    %v756 = vld [vmem:[#allocation9 + $0x3c] sm:$0xf]
    %v757 = vld [vmem:[%s6] sm:$0x1]
    %v759 = vlaneseq
    %v760 = vshrl.u32 %v759, 7
    %v761 = vsub.s32 0, %v760
    %v762 = vrot.slane %v757, %v761
    %v780 = vunpack.c.l.b16 %v741
    %v781 = vunpack.c.l.b16 %v742
    %v782 = vunpack.c.l.b16 %v743
    %v783 = vunpack.c.l.b16 %v744
    %v784 = vunpack.c.l.b16 %v745
    %v785 = vunpack.c.l.b16 %v746
    %v786 = vunpack.c.l.b16 %v747
    %v787 = vunpack.c.l.b16 %v748
    %v788 = vunpack.c.l.b16 %v749
    %v789 = vunpack.c.l.b16 %v750
    %v790 = vunpack.c.l.b16 %v751
    %v791 = vunpack.c.l.b16 %v752
    %v792 = vunpack.c.l.b16 %v753
    %v793 = vunpack.c.l.b16 %v754
    %v794 = vunpack.c.l.b16 %v755
    %v795 = vunpack.c.l.b16 %v756
    %v796 = vpack.c.b16 %v781, %v780
    %v797 = vpack.c.b16 %v783, %v782
    %v798 = vpack.c.b16 %v785, %v784
    %v799 = vpack.c.b16 %v787, %v786
    %v800 = vpack.c.b16 %v789, %v788
    %v801 = vpack.c.b16 %v791, %v790
    %v802 = vpack.c.b16 %v793, %v792
    %v803 = vpack.c.b16 %v795, %v794
    %812 = vmatprep.subr.bf16.mxu0 0
    %813 = vmatpush1.bf16.msra.mxu0 %v796
    %814 = vmatprep.subr.bf16.mxu0 0
    %815 = vmatpush1.bf16.msra.mxu0 %v797
    %816 = vmatprep.subr.bf16.mxu0 0
    %817 = vmatpush1.bf16.msra.mxu0 %v798
    %818 = vmatprep.subr.bf16.mxu0 0
    %819 = vmatpush1.bf16.msra.mxu0 %v799
    %820 = vmatprep.subr.bf16.mxu0 0
    %821 = vmatpush1.bf16.msra.mxu0 %v800
    %822 = vmatprep.subr.bf16.mxu0 0
    %823 = vmatpush1.bf16.msra.mxu0 %v801
    %824 = vmatprep.subr.bf16.mxu0 0
    %825 = vmatpush1.bf16.msra.mxu0 %v802
    %826 = vmatprep.subr.bf16.mxu0 0
    %827 = vmatpush1.bf16.msra.mxu0 %v803
    %828 = vmatprep.subr.bf16.mxu0 0
    %829 = vmatpush1.bf16.msra.mxu0 0
    %830 = vmatprep.subr.bf16.mxu0 0
    %831 = vmatpush1.bf16.msra.mxu0 0
    %832 = vmatprep.subr.bf16.mxu0 0
    %833 = vmatpush1.bf16.msra.mxu0 0
    %834 = vmatprep.subr.bf16.mxu0 0
    %835 = vmatpush1.bf16.msra.mxu0 0
    %836 = vmatprep.subr.bf16.mxu0 0
    %837 = vmatpush1.bf16.msra.mxu0 0
    %838 = vmatprep.subr.bf16.mxu0 0
    %839 = vmatpush1.bf16.msra.mxu0 0
    %840 = vmatprep.subr.bf16.mxu0 0
    %841 = vmatpush1.bf16.msra.mxu0 0
    %842 = vmatprep.subr.bf16.mxu0 0
    %843 = vmatpush1.bf16.msra.mxu0 0
    %844 = vmatprep.mubr.bf16.mxu0 0
    %845 = vmatmul.mubr.bf16.gmra.mrb[0].mxu0 %v740
    %v846 = vpop.f32.mrb[0].mxu0
    %v847 = vadd.f32 %v762, %v846
    %v848 = vpop.f32.mrb[0].mxu0
    %v849 = vpop.f32.mrb[0].mxu0
    %v850 = vpop.f32.mrb[0].mxu0
    %851 = vdwg.mxu0
    %v852 = vxor.u32 %v847, 2147483648
    %v853 = vmul.f32 %v852, 1.442695
    %v854 = vpow.pop %v853
    %v855 = vadd.f32 %v854, 1.0
    %v856 = vrcp.pop %v855
    %v857 = vmul.f32 1.0, %v856
    %v858 = vmul.f32 %v857, 0.1
    %v859 = vmul.f32 %v858, 1.442695
    %v860 = vpow.pop %v859
    %v861 = vlaneseq
    %v862 = vand.u32 %v861, 127
    %vm863 = vcmp.lt.s32.totalorder %v862, 4
    %v864 = vsel %vm863, %v860, 0.0
    %865 = vadd.xlane.f32.xlu0 %v864
    %v866 = vpop.xlane.xlu0 %865
    %v867 = vrcp.pop %v866
    %v868 = vmul.f32 %v864, %v867
    %v869 = vld [vmem:[#allocation2] sm:$0xff]
    %v870 = vadd.f32 %v868, 0.0
    %v871 = vadd.f32 %v869, %v870
    %872 = vst [vmem:[#allocation2] sm:$0xff] %v871
    // Predicated region
    $region50: #{tpu_custom_call.1} parent=1 // pred_check
      %p873 = pneg %p85
    $region51: #{tpu_custom_call.1} parent=1 // pred_check_branch
      %875 = sbr.rel (%p873) target = $region53
    $region52: #{tpu_custom_call.1} parent=1 // pred_region
      %v876 = vld [vmem:[#allocation2] sm:$0xff]
      %877 = vst [vmem:[#allocation11] sm:$0xff] %v876
    $region53: #{tpu_custom_call.1} parent=1 // pred_fallthru
      _
    // Predicated region
    $region54: #{tpu_custom_call.1} parent=1 // pred_check
      _
    $region55: #{tpu_custom_call.1} parent=1 // pred_check_branch
      %879 = sbr.rel (0) target = $region57
    $region56: #{tpu_custom_call.1} parent=1 // pred_region
      %s881 = ssub.s32 128, 128
      %882 = vsyncadd [#allocation5], %s881
      %s884 = sshll.u32 [#allocation11], 4
      %s885 = int_to_ptr.vmem [resolvable:$true] %s884
      %887 = dma.vmem_to_hbm [thread:$0]  %s885, 128, %s7, [#allocation5]
    $region57: #{tpu_custom_call.1} parent=1 // pred_fallthru
      _
    // Predicated region
    $region58: #{tpu_custom_call.1} parent=1 // pred_check
      _
    $region59: #{tpu_custom_call.1} parent=1 // pred_check_branch
      %889 = sbr.rel (0) target = $region61
    $region60: #{tpu_custom_call.1} parent=1 // pred_region
      %890 = dma.done [#allocation5], 128
    $region61: #{tpu_custom_call.1} parent=1 // pred_fallthru
      _
    %891 = vsyncpa [#allocation4], 1
    %892 = vsyncpa [#allocation7], 1
    %893 = vsyncpa [#allocation10], 1
    %894 = vsyncpa [#allocation5], 1

</llo_original>
